<compile_context>
chip_gen: v5e
topology: v5e:2x2
jax: 0.10.0
libtpu: 0.0.40
codegen_flags: <defaults>
</compile_context>

<pallas_src>
import math
import numpy as np
import jax
import jax.numpy as jnp
from jax.experimental import pallas as pl
from jax.experimental.pallas import tpu as pltpu

_LANE = 128      # TPU lane width (last-dim tiling granularity)
_SUBLANE = 8     # TPU sublane count (second-to-last-dim granularity)


def _sag_score_kernel(params_ref, xw_ref, at_ref, y_ref, s_ref):
    """One column tile of the SAGPooling score computation.

    params_ref : SMEM (1, 2) f32   -> [gcn_bias, sel_w / ||sel_w||]
    xw_ref     : VMEM (8, N_pad) bf16, X @ W_gcn replicated over 8 sublanes
    at_ref     : VMEM (N_pad, TM) bf16, column tile of A_hat^T
    y_ref      : VMEM (8, TM) f32, GCN score y = A_hat @ (X W) + b  (rows identical)
    s_ref      : VMEM (8, TM) f32, tanh(y * sel_scale)
    """
    # (8, N_pad) @ (N_pad, TM) on the MXU, f32 accumulation.
    y = jnp.dot(xw_ref[...], at_ref[...],
                preferred_element_type=jnp.float32) + params_ref[0, 0]
    y_ref[...] = y
    # Score math stays f32 (v5e VPU/EUP have no bf16 path).
    s_ref[...] = jnp.tanh(y * params_ref[0, 1])


def _round_up(v, m):
    return ((v + m - 1) // m) * m


def _choose_tile(n_pad, vmem_budget_bytes=24 << 20):
    """Largest column tile (multiple of 128 dividing n_pad) whose double-buffered
    bf16 (n_pad, tile) A-block stays under the VMEM budget."""
    tile = 512
    while tile > _LANE and (n_pad % tile != 0
                            or 2 * n_pad * tile * 2 > vmem_budget_bytes):
        tile //= 2
    return tile


def _gcn_normalized_adjacency_t(edge_index, num_nodes, n_pad):
    """A_hat^T = (D^-1/2 (A + I) D^-1/2)^T, zero-padded to (n_pad, n_pad).

    GCNConv aggregates messages source -> target, i.e. A[target, source] = 1,
    so the transpose is built directly as at[source, target] = 1 (no extra
    O(N^2) transpose pass over HBM).
    """
    src = edge_index[0]
    dst = edge_index[1]
    at = jnp.zeros((n_pad, n_pad), jnp.float32)
    at = at.at[src, dst].add(1.0)                       # A^T[source, target]
    diag = jnp.arange(num_nodes)
    at = at.at[diag, diag].add(1.0)                     # self loops
    deg = at[:num_nodes, :num_nodes].sum(axis=0)        # in-degree + 1 per node
    dinv = jnp.where(deg > 0, jax.lax.rsqrt(deg), 0.0)
    dinv = jnp.pad(dinv, (0, n_pad - num_nodes))
    return dinv[:, None] * at * dinv[None, :]


def sag_pooling(x, edge_index, gcn_w, gcn_b, sel_w, ratio=0.5, multiplier=1.0):
    """Pallas-backed SAGPooling forward (min_score=None, nonlinearity=tanh).

    Returns (x_out, edge_index_out, edge_attr_out, batch_out, perm, attn),
    matching the PyTorch module's output tuple (edge_attr_out is None).
    """
    N, C = x.shape
    n_pad = _round_up(N, _LANE)
    tm = _choose_tile(n_pad)
    grid = (n_pad // tm,)

    # Dense normalized adjacency (transposed), streamed in bf16.
    a_hat_t = _gcn_normalized_adjacency_t(edge_index, N, n_pad).astype(jnp.bfloat16)

    # Hoisted projection xw = X @ W_gcn (f32), zero-padded, replicated over 8
    # sublanes so the kernel's matmul result / stores use full (8, 128) tiles.
    xw = jnp.dot(x, gcn_w, preferred_element_type=jnp.float32)[:, 0]       # (N,)
    xw = jnp.pad(xw, (0, n_pad - N))
    xw8 = jnp.broadcast_to(xw[None, :], (_SUBLANE, n_pad)).astype(jnp.bfloat16)

    # Precomputed scalars -> SMEM: [gcn bias, sel_w / ||sel_w||].
    sel_scale = sel_w.reshape(()) * jax.lax.rsqrt(jnp.sum(sel_w.astype(jnp.float32) ** 2))
    params = jnp.stack([gcn_b.reshape(()).astype(jnp.float32),
                        sel_scale.astype(jnp.float32)]).reshape(1, 2)

    y8, s8 = pl.pallas_call(
        _sag_score_kernel,
        grid=grid,
        in_specs=[
            pl.BlockSpec(memory_space=pltpu.MemorySpace.SMEM),       # params (scalars)
            pl.BlockSpec((_SUBLANE, n_pad), lambda i: (0, 0)),       # xw, VMEM-resident
            pl.BlockSpec((n_pad, tm), lambda i: (0, i)),             # A_hat^T column tile
        ],
        out_specs=(
            pl.BlockSpec((_SUBLANE, tm), lambda i: (0, i)),          # y  (lane-dense)
            pl.BlockSpec((_SUBLANE, tm), lambda i: (0, i)),          # s  (lane-dense)
        ),
        out_shape=(
            jax.ShapeDtypeStruct((_SUBLANE, n_pad), jnp.float32),
            jax.ShapeDtypeStruct((_SUBLANE, n_pad), jnp.float32),
        ),
        compiler_params=pltpu.CompilerParams(
            dimension_semantics=("parallel",),
            vmem_limit_bytes=32 << 20,
        ),
    )(params, xw8, a_hat_t)

    y = y8[0, :N]      # GCN attention scores (attn), row 0 of the replicated slab
    s = s8[0, :N]      # tanh-normalized selection scores

    # TODO(synk): top-k selection & FilterEdges have data-dependent output shapes;
    # they are kept as JAX / host glue rather than faked in the kernel.
    k = int(math.ceil(ratio * N)) if isinstance(ratio, float) else int(ratio)
    _, perm = jax.lax.top_k(s, k)
    x_out = x[perm] * s[perm][:, None]           # scale only the k selected rows
    if multiplier != 1.0:
        x_out = multiplier * x_out

    # FilterEdges: keep edges with both endpoints selected, remap node ids.
    perm_np = np.asarray(perm)
    ei_np = np.asarray(edge_index)
    node_map = -np.ones((N,), dtype=np.int64)
    node_map[perm_np] = np.arange(k)
    keep = (node_map[ei_np[0]] >= 0) & (node_map[ei_np[1]] >= 0)
    edge_index_out = node_map[ei_np[:, keep]].astype(np.int32)

    batch_out = jnp.zeros((k,), jnp.int32)       # single-graph batch
    edge_attr_out = None                         # no edge features supplied
    attn = y.reshape(N, 1)                       # module returns the GCN output
    return x_out, edge_index_out, edge_attr_out, batch_out, perm, attn


if __name__ == "__main__":
    key = jax.random.PRNGKey(0)
    k_x, k_e, k_wg, k_ws = jax.random.split(key, 4)

    N, C = 16, 8                                 # small graph: 16 nodes, 8 features
    x = jax.random.normal(k_x, (N, C), jnp.float32)

    # Deterministic undirected edge set (no self loops).
    src = jax.random.randint(k_e, (24,), 0, N)
    dst = (src + 1 + jax.random.randint(jax.random.fold_in(k_e, 1), (24,), 0, N - 1)) % N
    edge_index = jnp.stack(
        [jnp.concatenate([src, dst]), jnp.concatenate([dst, src])], axis=0
    ).astype(jnp.int32)                          # (2, 48)

    # Parameter shapes from SAGPooling.__init__: GCNConv(C, 1), SelectTopK(1).
    gcn_w = jax.random.normal(k_wg, (C, 1), jnp.float32) * 0.3
    gcn_b = jnp.zeros((1,), jnp.float32)
    sel_w = jax.random.uniform(k_ws, (1, 1), jnp.float32, minval=-1.0, maxval=1.0)

    ratio, multiplier = 0.5, 1.0
    x_out, ei_out, ea_out, batch_out, perm, attn = sag_pooling(
        x, edge_index, gcn_w, gcn_b, sel_w, ratio=ratio, multiplier=multiplier
    )
    jax.block_until_ready((x_out, batch_out, perm, attn))

    # Reference check with the same bf16 operand quantization (f64 accumulation).
    n_pad = _round_up(N, _LANE)
    a_t_bf16 = _gcn_normalized_adjacency_t(edge_index, N, n_pad).astype(jnp.bfloat16)
    xw_bf16 = jnp.pad(
        jnp.dot(x, gcn_w, preferred_element_type=jnp.float32)[:, 0], (0, n_pad - N)
    ).astype(jnp.bfloat16)
    a_t_np = np.asarray(a_t_bf16.astype(jnp.float32), dtype=np.float64)
    xw_np = np.asarray(xw_bf16.astype(jnp.float32), dtype=np.float64)
    y_ref = (xw_np @ a_t_np)[:N] + float(gcn_b[0])
    s_ref = np.tanh(y_ref * float(sel_w[0, 0]) / float(jnp.sqrt(jnp.sum(sel_w ** 2))))
    k = int(math.ceil(ratio * N))
    perm_ref = np.argsort(-s_ref)[:k]
    x_ref = np.asarray(x)[perm_ref] * s_ref[perm_ref, None] * multiplier

    np.testing.assert_allclose(np.asarray(attn[:, 0]), y_ref, rtol=1e-2, atol=1e-3)
    assert np.array_equal(np.asarray(perm), perm_ref)
    np.testing.assert_allclose(np.asarray(x_out), x_ref, rtol=1e-2, atol=1e-3)

    print("KERNEL_OK")
</pallas_src>

<mosaic_0001>
module attributes {stable_mosaic.version = 11 : i64} {
  func.func @_sag_score_kernel(%arg0: i32, %arg1: memref<1x2xf32, #tpu.memory_space<smem>>, %arg2: memref<8x128xbf16, #tpu.memory_space<vmem>>, %arg3: memref<128x128xbf16, #tpu.memory_space<vmem>>, %arg4: memref<8x128xf32, #tpu.memory_space<vmem>>, %arg5: memref<8x128xf32, #tpu.memory_space<vmem>>) attributes {dimension_semantics = [#tpu.dimension_semantics<parallel>], iteration_bounds = array<i64: 1>, scalar_prefetch = 0 : i64, scratch_operands = 0 : i64, tpu.core_type = #tpu.core_type<tc>, window_params = [{transform_indices = @transform_0, window_bounds = array<i64: 1, 2>}, {pipeline_mode = #tpu.pipeline_mode<synchronous>, transform_indices = @transform_1, window_bounds = array<i64: 8, 128>}, {transform_indices = @transform_2, window_bounds = array<i64: 128, 128>}, {transform_indices = @transform_3, window_bounds = array<i64: 8, 128>}, {transform_indices = @transform_4, window_bounds = array<i64: 8, 128>}]} {
    %c0 = arith.constant 0 : index
    %c0_0 = arith.constant 0 : index
    %0 = vector.load %arg2[%c0, %c0_0] : memref<8x128xbf16, #tpu.memory_space<vmem>>, vector<8x128xbf16>
    %c0_1 = arith.constant 0 : index
    %c0_2 = arith.constant 0 : index
    %1 = vector.load %arg3[%c0_1, %c0_2] : memref<128x128xbf16, #tpu.memory_space<vmem>>, vector<128x128xbf16>
    %cst = arith.constant dense<0.000000e+00> : vector<8x128xf32>
    %2 = tpu.matmul %0, %1, %cst {dimension_numbers = #tpu.dot_dimension_numbers<[1], [0], [0], [1], [0, 0, 1, 1], [], []>} : vector<8x128xbf16>, vector<128x128xbf16>, vector<8x128xf32> -> vector<8x128xf32>
    %c0_3 = arith.constant 0 : index
    %c0_4 = arith.constant 0 : index
    %3 = memref.load %arg1[%c0_3, %c0_4] : memref<1x2xf32, #tpu.memory_space<smem>>
    %4 = vector.broadcast %3 : f32 to vector<8x128xf32>
    %5 = arith.addf %2, %4 : vector<8x128xf32>
    %c0_5 = arith.constant 0 : index
    %c0_6 = arith.constant 0 : index
    %6 = vector.load %arg4[%c0_5, %c0_6] : memref<8x128xf32, #tpu.memory_space<vmem>>, vector<8x128xf32>
    tpu.vector_store %arg4[%c0_5, %c0_6], %5 {strides = array<i32>} : memref<8x128xf32, #tpu.memory_space<vmem>>, vector<8x128xf32>,
    %c0_7 = arith.constant 0 : index
    %c1 = arith.constant 1 : index
    %7 = memref.load %arg1[%c0_7, %c1] : memref<1x2xf32, #tpu.memory_space<smem>>
    %8 = vector.broadcast %7 : f32 to vector<8x128xf32>
    %9 = arith.mulf %5, %8 : vector<8x128xf32>
    %10 = math.tanh %9 : vector<8x128xf32>
    %c0_8 = arith.constant 0 : index
    %c0_9 = arith.constant 0 : index
    %11 = vector.load %arg5[%c0_8, %c0_9] : memref<8x128xf32, #tpu.memory_space<vmem>>, vector<8x128xf32>
    tpu.vector_store %arg5[%c0_8, %c0_9], %10 {strides = array<i32>} : memref<8x128xf32, #tpu.memory_space<vmem>>, vector<8x128xf32>,
    return
  }
  func.func @transform_0(%arg0: i32) -> (i32, i32) {
    %c0_i32 = arith.constant 0 : i32
    %c0_i32_0 = arith.constant 0 : i32
    %c0_i32_1 = arith.constant 0 : i32
    return %c0_i32, %c0_i32_0 : i32, i32
  }
  func.func @transform_1(%arg0: i32) -> (i32, i32) {
    %c0_i32 = arith.constant 0 : i32
    %c0_i32_0 = arith.constant 0 : i32
    %c0_i32_1 = arith.constant 0 : i32
    return %c0_i32, %c0_i32_0 : i32, i32
  }
  func.func @transform_2(%arg0: i32) -> (i32, i32) {
    %c0_i32 = arith.constant 0 : i32
    %c0_i32_0 = arith.constant 0 : i32
    return %c0_i32, %arg0 : i32, i32
  }
  func.func @transform_3(%arg0: i32) -> (i32, i32) {
    %c0_i32 = arith.constant 0 : i32
    %c0_i32_0 = arith.constant 0 : i32
    return %c0_i32, %arg0 : i32, i32
  }
  func.func @transform_4(%arg0: i32) -> (i32, i32) {
    %c0_i32 = arith.constant 0 : i32
    %c0_i32_0 = arith.constant 0 : i32
    return %c0_i32, %arg0 : i32, i32
  }
}

</mosaic_0001>

<llo_original>
// kernel: tpu_custom_call.1
$region0: #{tpu_custom_call.1}
  #allocation0 [shape = 'u32[]', space=smem, size = 0x4, offset = 0x4, fixed_abs, tag = 'smem constant byte address 0x4 - core index']
  #allocation1 [shape = 'u32[72,128]{1,0:T(1,128)}', space=vmem, size = 0x9000, scoped, tag = 'internal scratch']
  %s0 = inlined_call_operand.hbm [shape: f32[1,2], index: 0, kind: input, shape index: {}]
  %s1 = inlined_call_operand.hbm [shape: bf16[8,128], index: 1, kind: input, shape index: {}]
  %s2 = inlined_call_operand.hbm [shape: bf16[128,128], index: 2, kind: input, shape index: {}]
  %s3 = inlined_call_operand.hbm [shape: f32[8,128], index: 3, kind: output, shape index: {0}]
  %s4 = inlined_call_operand.hbm [shape: f32[8,128], index: 4, kind: output, shape index: {1}]
  %5 = xla_tuple %s3, %s4
  %s6 = sld [smem:[#allocation0]]
  $region42: #{tpu_custom_call.1} parent=0
    _
  %s8 = ssub.s32 1, %s6
  %s9 = scalar_select 0, %s8, %s6
  $region1: #{tpu_custom_call.1} parent=0
    #allocation2 [shape = 'u8[512]{0}', space=smem, size = 0x200, scoped, tag = 'input window, operand 0, single buffered']
    #allocation3 [shape = 's32[1]{0}', space=sflag, size = 0x4, scoped, tag = 'scoped memory for tpu_custom_call.1']
    #allocation4 [shape = 's32[1]{0}', space=sflag, size = 0x4, scoped, tag = 'scoped memory for tpu_custom_call.1']
    #allocation5 [shape = 's32[1]{0}', space=sflag, size = 0x4, scoped, tag = 'scoped memory for tpu_custom_call.1']
    #allocation6 [shape = 'u8[2048]{0}', space=vmem, size = 0x800, scoped, tag = 'input window, operand 1, single buffered']
    #allocation7 [shape = 'u8[32768]{0}', space=vmem, size = 0x8000, scoped, tag = 'input window, operand 2, single buffered']
    #allocation8 [shape = 's32[1]{0}', space=sflag, size = 0x4, scoped, tag = 'scoped memory for tpu_custom_call.1']
    #allocation9 [shape = 'u8[4096]{0}', space=vmem, size = 0x1000, scoped, tag = 'output window, operand 0, single buffered']
    #allocation10 [shape = 'u8[4096]{0}', space=vmem, size = 0x1000, scoped, tag = 'output window, operand 1, single buffered']
    #allocation11 [shape = 's32[1]{0}', space=sflag, size = 0x4, scoped, tag = 'scoped memory for tpu_custom_call.1']
    %10 = vsyncpa [#allocation5], 0
    %11 = vsyncpa [#allocation3], 0
    %12 = vsyncpa [#allocation8], 0
    %13 = vsyncpa [#allocation4], 0
    %14 = vsyncpa [#allocation11], 0
    // Predicated region
    $region2: #{tpu_custom_call.1} parent=1 // pred_check
      _
    $region3: #{tpu_custom_call.1} parent=1 // pred_check_branch
      %16 = sbr.rel (0) target = $region5
    $region4: #{tpu_custom_call.1} parent=1 // pred_region
      %18 = vsyncadd [#allocation5], 0
      %s20 = sshll.u32 %s0, 4
      %s21 = int_to_ptr.hbm [resolvable:$true] %s20
      %23 = dma.hbm_to_smem %s21, 16, [#allocation2], [#allocation5]
    $region5: #{tpu_custom_call.1} parent=1 // pred_fallthru
      _
    // Predicated region
    $region6: #{tpu_custom_call.1} parent=1 // pred_check
      _
    $region7: #{tpu_custom_call.1} parent=1 // pred_check_branch
      %25 = sbr.rel (0) target = $region9
    $region8: #{tpu_custom_call.1} parent=1 // pred_region
      %27 = vsyncadd [#allocation3], 0
      %s29 = sshll.u32 %s1, 4
      %s30 = int_to_ptr.hbm [resolvable:$true] %s29
      %s31 = sshll.u32 [#allocation6], 4
      %s32 = int_to_ptr.vmem [resolvable:$true] %s31
      %34 = dma.hbm_to_vmem [thread:$0]  %s30, 64, %s32, [#allocation3]
    $region9: #{tpu_custom_call.1} parent=1 // pred_fallthru
      _
    // Predicated region
    $region10: #{tpu_custom_call.1} parent=1 // pred_check
      _
    $region11: #{tpu_custom_call.1} parent=1 // pred_check_branch
      %36 = sbr.rel (0) target = $region13
    $region12: #{tpu_custom_call.1} parent=1 // pred_region
      %38 = vsyncadd [#allocation8], 0
      %s39 = sshll.u32 %s2, 4
      %s40 = int_to_ptr.hbm [resolvable:$true] %s39
      %s41 = sshll.u32 [#allocation7], 4
      %s42 = int_to_ptr.vmem [resolvable:$true] %s41
      %47 = dma.hbm_to_vmem [thread:$0]  %s40, 1024, %s42, [#allocation8], 64, 64, 4
    $region13: #{tpu_custom_call.1} parent=1 // pred_fallthru
      _
    // Predicated region
    $region14: #{tpu_custom_call.1} parent=1 // pred_check
      _
    $region15: #{tpu_custom_call.1} parent=1 // pred_check_branch
      %49 = sbr.rel (0) target = $region17
    $region16: #{tpu_custom_call.1} parent=1 // pred_region
      %51 = dma.done [#allocation5], 16
    $region17: #{tpu_custom_call.1} parent=1 // pred_fallthru
      _
    // Predicated region
    $region18: #{tpu_custom_call.1} parent=1 // pred_check
      _
    $region19: #{tpu_custom_call.1} parent=1 // pred_check_branch
      %53 = sbr.rel (0) target = $region21
    $region20: #{tpu_custom_call.1} parent=1 // pred_region
      %55 = dma.done [#allocation3], 64
    $region21: #{tpu_custom_call.1} parent=1 // pred_fallthru
      _
    // Predicated region
    $region22: #{tpu_custom_call.1} parent=1 // pred_check
      _
    $region23: #{tpu_custom_call.1} parent=1 // pred_check_branch
      %57 = sbr.rel (0) target = $region25
    $region24: #{tpu_custom_call.1} parent=1 // pred_region
      %59 = dma.done [#allocation8], 1024
    $region25: #{tpu_custom_call.1} parent=1 // pred_fallthru
      _
    %60 = sfence
    %v61 = vld [vmem:[#allocation6] sm:$0xf]
    %v62 = vld [vmem:[#allocation7] sm:$0xf]
    %v63 = vld [vmem:[#allocation7 + $0x4] sm:$0xf]
    %v64 = vld [vmem:[#allocation7 + $0x8] sm:$0xf]
    %v65 = vld [vmem:[#allocation7 + $0xc] sm:$0xf]
    %v66 = vld [vmem:[#allocation7 + $0x10] sm:$0xf]
    %v67 = vld [vmem:[#allocation7 + $0x14] sm:$0xf]
    %v68 = vld [vmem:[#allocation7 + $0x18] sm:$0xf]
    %v69 = vld [vmem:[#allocation7 + $0x1c] sm:$0xf]
    %v70 = vld [vmem:[#allocation7 + $0x20] sm:$0xf]
    %v71 = vld [vmem:[#allocation7 + $0x24] sm:$0xf]
    %v72 = vld [vmem:[#allocation7 + $0x28] sm:$0xf]
    %v73 = vld [vmem:[#allocation7 + $0x2c] sm:$0xf]
    %v74 = vld [vmem:[#allocation7 + $0x30] sm:$0xf]
    %v75 = vld [vmem:[#allocation7 + $0x34] sm:$0xf]
    %v76 = vld [vmem:[#allocation7 + $0x38] sm:$0xf]
    %v77 = vld [vmem:[#allocation7 + $0x3c] sm:$0xf]
    %s78 = sld [smem:[#allocation2]]
    %v79 = vstv %s78
    %v96 = vunpack.c.l.b16 %v62
    %v97 = vunpack.c.l.b16 %v63
    %v98 = vunpack.c.l.b16 %v64
    %v99 = vunpack.c.l.b16 %v65
    %v100 = vunpack.c.l.b16 %v66
    %v101 = vunpack.c.l.b16 %v67
    %v102 = vunpack.c.l.b16 %v68
    %v103 = vunpack.c.l.b16 %v69
    %v104 = vunpack.c.l.b16 %v70
    %v105 = vunpack.c.l.b16 %v71
    %v106 = vunpack.c.l.b16 %v72
    %v107 = vunpack.c.l.b16 %v73
    %v108 = vunpack.c.l.b16 %v74
    %v109 = vunpack.c.l.b16 %v75
    %v110 = vunpack.c.l.b16 %v76
    %v111 = vunpack.c.l.b16 %v77
    %v112 = vpack.c.b16 %v97, %v96
    %v113 = vpack.c.b16 %v99, %v98
    %v114 = vpack.c.b16 %v101, %v100
    %v115 = vpack.c.b16 %v103, %v102
    %v116 = vpack.c.b16 %v105, %v104
    %v117 = vpack.c.b16 %v107, %v106
    %v118 = vpack.c.b16 %v109, %v108
    %v119 = vpack.c.b16 %v111, %v110
    %128 = vmatpush.bf16.msra.mxu0 %v119
    %129 = vmatpush.bf16.msra.mxu0 %v118
    %130 = vmatpush.bf16.msra.mxu0 %v117
    %131 = vmatpush.bf16.msra.mxu0 %v116
    %132 = vmatpush.bf16.msra.mxu0 %v115
    %133 = vmatpush.bf16.msra.mxu0 %v114
    %134 = vmatpush.bf16.msra.mxu0 %v113
    %135 = vmatpush.bf16.msra.mxu0 %v112
    %136 = vmatmul.bf16.gmra.mxu0 %v61
    %v137 = vpop.f32.mrf.mxu0
    %v138 = vadd.f32 %v79, %v137
    %v139 = vpop.f32.mrf.mxu0
    %140 = vdwg.mxu0
    %141 = vst [vmem:[#allocation9] sm:$0xff] %v138
    %s142 = sld [smem:[#allocation2 + $0x1]]
    %v143 = vstv %s142
    %v144 = vmul.f32 %v138, %v143
    %v145 = vtanh.pop %v144
    %146 = vst [vmem:[#allocation10] sm:$0xff] %v145
    // Predicated region
    $region26: #{tpu_custom_call.1} parent=1 // pred_check
      _
    $region27: #{tpu_custom_call.1} parent=1 // pred_check_branch
      %148 = sbr.rel (0) target = $region29
    $region28: #{tpu_custom_call.1} parent=1 // pred_region
      %150 = vsyncadd [#allocation4], 0
      %s152 = sshll.u32 [#allocation9], 4
      %s153 = int_to_ptr.vmem [resolvable:$true] %s152
      %s154 = sshll.u32 %s3, 4
      %s155 = int_to_ptr.hbm [resolvable:$true] %s154
      %157 = dma.vmem_to_hbm [thread:$0]  %s153, 128, %s155, [#allocation4]
    $region29: #{tpu_custom_call.1} parent=1 // pred_fallthru
      _
    // Predicated region
    $region30: #{tpu_custom_call.1} parent=1 // pred_check
      _
    $region31: #{tpu_custom_call.1} parent=1 // pred_check_branch
      %159 = sbr.rel (0) target = $region33
    $region32: #{tpu_custom_call.1} parent=1 // pred_region
      %161 = vsyncadd [#allocation11], 0
      %s163 = sshll.u32 [#allocation10], 4
      %s164 = int_to_ptr.vmem [resolvable:$true] %s163
      %s165 = sshll.u32 %s4, 4
      %s166 = int_to_ptr.hbm [resolvable:$true] %s165
      %168 = dma.vmem_to_hbm [thread:$0]  %s164, 128, %s166, [#allocation11]
    $region33: #{tpu_custom_call.1} parent=1 // pred_fallthru
      _
    // Predicated region
    $region34: #{tpu_custom_call.1} parent=1 // pred_check
      _
    $region35: #{tpu_custom_call.1} parent=1 // pred_check_branch
      %170 = sbr.rel (0) target = $region37
    $region36: #{tpu_custom_call.1} parent=1 // pred_region
      %172 = dma.done [#allocation4], 128
    $region37: #{tpu_custom_call.1} parent=1 // pred_fallthru
      _
    // Predicated region
    $region38: #{tpu_custom_call.1} parent=1 // pred_check
      _
    $region39: #{tpu_custom_call.1} parent=1 // pred_check_branch
      %174 = sbr.rel (0) target = $region41
    $region40: #{tpu_custom_call.1} parent=1 // pred_region
      %176 = dma.done [#allocation11], 128
    $region41: #{tpu_custom_call.1} parent=1 // pred_fallthru
      _
    %177 = vsyncpa [#allocation3], 1
    %178 = vsyncpa [#allocation8], 1
    %179 = vsyncpa [#allocation4], 1
    %180 = vsyncpa [#allocation11], 1
    %181 = vsyncpa [#allocation5], 1

</llo_original>
